<compile_context>
chip_gen: v7x
topology: tpu7x:2x2x1
jax: 0.10.0
libtpu: 0.0.40
codegen_flags: <defaults>
</compile_context>

<pallas_src>
import math
import jax
import jax.numpy as jnp
from jax import lax
from jax.experimental import pallas as pl
from jax.experimental.pallas import tpu as pltpu

PAD_ID = -1
MASK_LARGE = 1e30   # finite "infinite distance" so downstream math stays NaN-free


# ------------------------------------------------------------------
# Per-chip tiling / VMEM budget
# ------------------------------------------------------------------
def _chip_budget():
    """VMEM scoped limit, streamed-tile cap and pipeline depth per chip.

    v7x has 64 MiB VMEM per TensorCore -> keep the scoped limit well below the
    physical size and stay on default double buffering with <=1024-lane tiles;
    v5e / v6e (128 MiB) can afford bigger tiles and a 3-deep streamed pipeline.
    """
    try:
        cap = int(pltpu.get_tpu_info().vmem_capacity_bytes)
    except Exception:                 # no TPU info -> be conservative (v7x-safe)
        cap = 64 << 20
    if cap <= (64 << 20):             # v7x-class part
        return dict(vmem=48 << 20, tile=1024, buf=2)
    return dict(vmem=96 << 20, tile=4096, buf=3)   # v5e / v6e


def _pick_tile(n, cap):
    """Largest multiple of 128 that divides n, capped at `cap`; n if not 128-aligned."""
    if n % 128 != 0:
        return n
    cap = max(128, cap - cap % 128)
    t = min(cap, n)
    t -= t % 128
    while t >= 128:
        if n % t == 0:
            return t
        t -= 128
    return n


def _stream_tile(n, rows, itemsize, budget):
    """Tile size for a streamed (rows, tile) operand: keep the `buf` in-flight
    copies within ~half of the scoped-VMEM budget, capped per chip."""
    per_lane = rows * itemsize * budget["buf"]
    cap = (budget["vmem"] // 2) // max(per_lane, 1)
    return _pick_tile(n, min(budget["tile"], max(128, cap)))


def _mix_tile(v, bp, kp, budget):
    """Vocab tile for the mix kernel: bound the (Bp, Kp, tile) bf16 one-hot plus
    a handful of (Bp, tile) f32 temporaries to ~1/4 of the VMEM budget."""
    per_lane = bp * kp * 2 + bp * 4 * 8
    cap = (budget["vmem"] // 4) // max(per_lane, 1)
    return _pick_tile(v, min(budget["tile"], max(128, cap)))


def _stream_spec(shape, index_map, count, buf):
    """Deepen the pipeline on a streamed operand only when it pays off."""
    if buf > 2 and count >= buf + 1:
        return pl.BlockSpec(shape, index_map, pipeline_mode=pl.Buffered(buf))
    return pl.BlockSpec(shape, index_map)


# ------------------------------------------------------------------
# Kernel 1: masked squared-L2 distance   (TokenIndex.search core)
#   grid = (B, N_tiles), both parallel; bf16 MXU dot, mask folded into sq,
#   |q|^2 term hoisted out (per-row constant, re-added after top-k).
# ------------------------------------------------------------------
def knn_distance_kernel(q_ref, e_ref, sq_ref, dist_ref):
    dot = jnp.dot(q_ref[0], e_ref[0], preferred_element_type=jnp.float32)  # (1, tn)
    dist_ref[0] = sq_ref[0] - 2.0 * dot


def knn_distance(q, e, sq, budget):
    B, _, D = q.shape
    N = e.shape[-1]
    tn = _stream_tile(N, D, 2, budget)
    nt = max(1, N // tn)
    e_spec = _stream_spec((1, D, tn), lambda b, j: (b, 0, j), nt, budget["buf"])

    return pl.pallas_call(
        knn_distance_kernel,
        out_shape=jax.ShapeDtypeStruct((B, 1, N), jnp.float32),
        grid=(B, nt),
        in_specs=[pl.BlockSpec((1, 1, D), lambda b, j: (b, 0, 0)),
                  e_spec,
                  pl.BlockSpec((1, 1, tn), lambda b, j: (b, 0, j))],
        out_specs=pl.BlockSpec((1, 1, tn), lambda b, j: (b, 0, j)),
        compiler_params=pltpu.CompilerParams(
            dimension_semantics=("parallel", "parallel"),
            vmem_limit_bytes=budget["vmem"]),
    )(q, e, sq)


# ------------------------------------------------------------------
# Kernel 2: LM head matmul, tiled over the vocab axis (parallel grid)
#   rows padded to 8 by the caller -> full-sublane MXU LHS and stores.
# ------------------------------------------------------------------
def lm_head_kernel(h_ref, w_ref, o_ref):
    o_ref[...] = jnp.dot(h_ref[...], w_ref[...], preferred_element_type=jnp.float32)


def lm_head(h, w, budget):
    Bp, D = h.shape
    V = w.shape[1]
    tv = _stream_tile(V, D, 2, budget)
    nv = max(1, V // tv)
    w_spec = _stream_spec((D, tv), lambda j: (0, j), nv, budget["buf"])

    return pl.pallas_call(
        lm_head_kernel,
        out_shape=jax.ShapeDtypeStruct((Bp, V), jnp.float32),
        grid=(nv,),
        in_specs=[pl.BlockSpec((Bp, D), lambda j: (0, 0)), w_spec],
        out_specs=pl.BlockSpec((Bp, tv), lambda j: (0, j)),
        compiler_params=pltpu.CompilerParams(
            dimension_semantics=("parallel",),
            vmem_limit_bytes=budget["vmem"]),
    )(h, w)


# ------------------------------------------------------------------
# Kernel 3: softmaxes + MXU scatter/gather + inter_coef + mixing + log
#   grid = (V_tiles,), all (padded-to-8) batch rows per step; vocab axis is
#   "arbitrary" because the gathered-probability accumulator spans all tiles.
# ------------------------------------------------------------------
def make_mix_kernel(temp, alpha, tau, scale):
    inv_temp = 1.0 / temp
    inv_scale = 1.0 / scale
    inv_tau = 1.0 / tau

    def mix_kernel(lm_ref, lse_ref, knn_ref, vals_ref, kvalid_ref, iota_ref,
                   lmlog_ref, knnlog_ref, raw_ref, coef_ref,
                   prob_sc, coef_sc, gath_sc):
        j = pl.program_id(0)
        nv = pl.num_programs(0)
        bp, tv = lm_ref.shape
        kp = knn_ref.shape[-1]

        # ---- once per row: softmax over K neighbours + interpolation coef ----
        @pl.when(j == 0)
        def _():
            knn = knn_ref[...]                                   # (Bp, Kp) f32
            valid = kvalid_ref[...] > 0.0                        # (1, Kp): K -> Kp padding
            s = knn * inv_scale
            ms = jnp.max(s, axis=-1, keepdims=True)
            es = jnp.exp(s - ms)
            prob_sc[...] = es * pl.reciprocal(
                jnp.sum(es, axis=-1, keepdims=True), approx=True)
            mx = jnp.max(knn, axis=-1, keepdims=True)
            mn = jnp.min(jnp.where(valid, knn, MASK_LARGE), axis=-1, keepdims=True)
            # mn == 0 (all k distances exactly 0) would be 0/0 in the torch
            # reference; use the max==min limit (ratio -> 1) instead of NaN.
            ratio = jnp.where(mn == 0.0, 1.0,
                              mx / jnp.where(mn == 0.0, -1.0, mn))
            coef = jax.nn.sigmoid((ratio - alpha) * inv_tau)
            # fully-masked guard: no valid neighbour -> pure LM distribution
            coef_sc[...] = jnp.where(mx <= -0.5 * MASK_LARGE, 1.0, coef)
            gath_sc[...] = jnp.zeros_like(gath_sc)

        coef = coef_sc[...]                                      # (Bp, 1)
        knn_raw_probs = prob_sc[...]                             # (Bp, Kp)

        # ---- LM half for this vocab tile, fully in log-domain ----
        z = lm_ref[...] * inv_temp                               # (Bp, tv)
        lse = lse_ref[...]                                       # (Bp, 1)
        lm_log = jnp.log(coef) + (z - lse)                       # log(coef * lm_probs)
        p = jnp.exp(z - lse)                                     # lm_probs tile

        # ---- one-hot scatter / gather through the MXU (row-batched) ----
        col = iota_ref[...] + j * tv                             # resident base iota
        idx = vals_ref[...]                                      # (Bp, Kp), PAD already -> 0
        onehot = (idx.reshape(bp, kp, 1) ==
                  col.reshape(1, 1, tv)).astype(jnp.bfloat16)    # (Bp, Kp, tv)

        # `knn_probs[:, 0] = 0` of the reference is applied on the (Bp, Kp)
        # scatter source (drop every contribution targeting vocab id 0)
        # instead of a V-length column mask.
        src = jnp.where(idx == 0, 0.0, knn_raw_probs).astype(jnp.bfloat16)
        knn_probs = jnp.einsum('bik,bkv->biv', src.reshape(bp, 1, kp), onehot,
                               preferred_element_type=jnp.float32)[:, 0, :]
        gath_sc[...] += jnp.einsum(
            'biv,bkv->bik', p.astype(jnp.bfloat16).reshape(bp, 1, tv), onehot,
            preferred_element_type=jnp.float32)[:, 0, :]

        lmlog_ref[...] = lm_log
        knnlog_ref[...] = jnp.log((1.0 - coef) * knn_probs)      # -inf at zero probs (as torch)

        @pl.when(j == nv - 1)
        def _():
            # knn_mixed_probs = gather(coef*lm_probs, vals0); the torch gather
            # indexes the LM half of the concatenated probs (ids < vocab_size).
            raw_ref[...] = coef * gath_sc[...] + 1e-6 * knn_raw_probs
            coef_ref[...] = jnp.broadcast_to(coef, coef_ref.shape)   # lane-dense store

    return mix_kernel


def mix(lm_logits_p, knn_scores, vals0, *, num_rows, temp, alpha, tau,
        hidden_dim, budget):
    Bp, V = lm_logits_p.shape
    B, K = knn_scores.shape
    Kp = ((K + 127) // 128) * 128          # lane-dense K axis

    knn_p = jnp.full((Bp, Kp), -MASK_LARGE, jnp.float32).at[:B, :K].set(
        knn_scores.astype(jnp.float32))
    idx_p = jnp.zeros((Bp, Kp), jnp.int32).at[:B, :K].set(
        jnp.where(vals0 == PAD_ID, 0, vals0).astype(jnp.int32))
    kvalid = (jnp.arange(Kp, dtype=jnp.int32) < K).astype(jnp.float32).reshape(1, Kp)

    lm_f32 = lm_logits_p.astype(jnp.float32)
    # TODO(synk): fuse this logsumexp into the lm_head kernel (running m/l
    # scratch accumulators) to drop one (Bp, V) HBM read; kept in XLA so the
    # lm_head vocab axis stays "parallel" for v7x megacore.
    lse = jax.nn.logsumexp(lm_f32 * (1.0 / temp), axis=-1, keepdims=True)

    tv = _mix_tile(V, Bp, Kp, budget)
    nv = max(1, V // tv)
    base_iota = jnp.arange(tv, dtype=jnp.int32).reshape(1, tv)

    kern = make_mix_kernel(float(temp), float(alpha), float(tau),
                           math.sqrt(float(hidden_dim)))
    lm_log, knn_log, raw, coef = pl.pallas_call(
        kern,
        out_shape=(jax.ShapeDtypeStruct((Bp, V), jnp.float32),
                   jax.ShapeDtypeStruct((Bp, V), jnp.float32),
                   jax.ShapeDtypeStruct((Bp, Kp), jnp.float32),
                   jax.ShapeDtypeStruct((Bp, 128), jnp.float32)),
        grid=(nv,),
        in_specs=[pl.BlockSpec((Bp, tv), lambda j: (0, j)),    # lm logits tile
                  pl.BlockSpec((Bp, 1), lambda j: (0, 0)),     # logsumexp (resident)
                  pl.BlockSpec((Bp, Kp), lambda j: (0, 0)),    # knn scores (resident)
                  pl.BlockSpec((Bp, Kp), lambda j: (0, 0)),    # neighbour ids (resident)
                  pl.BlockSpec((1, Kp), lambda j: (0, 0)),     # K-lane validity (resident)
                  pl.BlockSpec((1, tv), lambda j: (0, 0))],    # base vocab iota (resident)
        out_specs=(pl.BlockSpec((Bp, tv), lambda j: (0, j)),
                   pl.BlockSpec((Bp, tv), lambda j: (0, j)),
                   pl.BlockSpec((Bp, Kp), lambda j: (0, 0)),
                   pl.BlockSpec((Bp, 128), lambda j: (0, 0))),
        scratch_shapes=[pltpu.VMEM((Bp, Kp), jnp.float32),     # knn_raw_probs
                        pltpu.VMEM((Bp, 1), jnp.float32),      # inter coef
                        pltpu.VMEM((Bp, Kp), jnp.float32)],    # gathered lm_probs acc
        compiler_params=pltpu.CompilerParams(
            # gathered-prob accumulator makes the vocab axis a reduction.
            # TODO(synk): split it in two halves for v7x 2-TC parallelism.
            dimension_semantics=("arbitrary",),
            vmem_limit_bytes=budget["vmem"]),
    )(lm_f32, lse, knn_p, idx_p, kvalid, base_iota)

    logits = jnp.concatenate([lm_log[:num_rows], knn_log[:num_rows]], axis=-1)
    return logits, raw[:num_rows, :K], coef[:num_rows, :1]


# ------------------------------------------------------------------
# TokenIndex.build_index  (JAX glue on synthetic LM hidden states)
# ------------------------------------------------------------------
def build_index(doc_ids, tokens, token_poses, emb, pad_id=PAD_ID):
    # TODO(synk): LM hidden-state extraction (hidden_states[-2]) replaced by
    # the deterministic synthetic embeddings `emb`.
    bsz, passage_k = doc_ids.shape
    max_len = tokens.shape[-1] - 1
    knn_ids = doc_ids.reshape(-1, 1) * max_len + (token_poses[:, 1:] - 1)
    vals = tokens[:, 1:]
    token_mask = (token_poses[:, :-1] != pad_id) & (doc_ids.reshape(-1, 1) != -1)

    emb_f32 = emb.astype(jnp.float32)
    tok_embeddings = jnp.where(token_mask[:, :, None], emb, 0).astype(jnp.bfloat16)
    # squared norms kept in f32 (torch stores them bf16; f32 keeps top-k stable);
    # validity mask folded in as a large additive penalty so the distance kernel
    # needs no separate int32 mask stream.
    tok_square = jnp.where(token_mask, jnp.sum(emb_f32 ** 2, -1),
                           MASK_LARGE).astype(jnp.float32)

    D = emb.shape[-1]
    N = max_len * passage_k
    tok_embeddings = jnp.transpose(tok_embeddings.reshape(bsz, N, D), (0, 2, 1))  # (B, D, N)
    return dict(emb=tok_embeddings,
                sq=tok_square.reshape(bsz, 1, N),
                knn_ids=knn_ids.reshape(bsz, 1, N),
                vals=vals.reshape(bsz, 1, N),
                max_len=max_len)


# ------------------------------------------------------------------
# TokenIndex.search  (distance kernel + top-k + n-gram gather glue)
# ------------------------------------------------------------------
def token_search(index, q, k, window, pad_id, budget):
    # partial distances |e|^2(+mask) - 2 q.e from the Pallas kernel; the |q|^2
    # term is a per-row constant, re-added after top-k (ordering unchanged).
    dist = knn_distance(q, index['emb'], index['sq'], budget)      # (B, 1, N) f32
    B, _, N = dist.shape
    qsq = jnp.sum(q.astype(jnp.float32) ** 2, axis=-1)             # (B, 1)
    # TODO(synk): fuse a running partial top-k accumulator into knn_distance so
    # the full (B, N) distance row never round-trips HBM at corpus scale.
    scores, idx = lax.top_k(-dist.reshape(B, N), k)
    # clamp: a true squared distance is >= 0; guards rounding-induced sign flips
    # so max/min in the interpolation coefficient keep their sign.
    raw_knn_scores = jnp.minimum(scores - qsq, 0.0)                # (B, k) == -distance

    idx3 = idx.reshape(B, 1, k)
    offs = jnp.arange(window, dtype=idx.dtype).reshape(1, 1, 1, window)
    idx_flat = (idx3[..., None] + offs).reshape(B, 1, k * window)
    vals_pad = jnp.concatenate(
        [index['vals'], jnp.full((B, 1, window), pad_id, index['vals'].dtype)], -1)
    knn_pad = jnp.concatenate(
        [index['knn_ids'], jnp.full((B, 1, window), pad_id, index['knn_ids'].dtype)], -1)
    tokens = jnp.take_along_axis(vals_pad, idx_flat, axis=-1).reshape(B, 1, k, window)
    knn_ids = jnp.take_along_axis(knn_pad, idx_flat, axis=-1).reshape(B, 1, k, window)
    doc_ids = knn_ids // index['max_len']
    poses = knn_ids % index['max_len']
    if window > 1:
        m = poses[..., 1:] > poses[..., :-1]
        tokens = jnp.concatenate([tokens[..., :1], jnp.where(m, tokens[..., 1:], pad_id)], -1)
        doc_ids = jnp.concatenate([doc_ids[..., :1], jnp.where(m, doc_ids[..., 1:], pad_id)], -1)
        poses = jnp.concatenate([poses[..., :1], jnp.where(m, poses[..., 1:], pad_id)], -1)
    return (raw_knn_scores.reshape(-1, k),
            tokens.reshape(-1, k, window),
            doc_ids.reshape(-1, k, window),
            poses.reshape(-1, k, window))


# ------------------------------------------------------------------
# KNNTransformer.forward  (generation mode, ngram_mask=None)
# ------------------------------------------------------------------
def knn_transformer_forward(params, index, tokens, *, temp, alpha, tau,
                            token_k, window, pad_id):
    budget = _chip_budget()
    # TODO(synk): pretrained Llama forward replaced by a synthetic deterministic
    # embedding + tanh projection producing the penultimate hidden state.
    last_tok = tokens[:, -1]
    h_last = jnp.tanh(params['embed'][last_tok] @ params['w_h']).astype(jnp.bfloat16)
    B, D = h_last.shape

    # pad the row (sublane) dimension to 8 so LM-head / mix work on full vregs
    Bp = ((max(B, 8) + 7) // 8) * 8
    hp = jnp.zeros((Bp, D), h_last.dtype).at[:B].set(h_last)

    lm_logits = lm_head(hp, params['w_head'], budget)              # Pallas (Bp, V) f32

    q = h_last[:, None, :]                                         # (B, 1, D) bf16
    raw_knn_scores, vals, doc_ids, poses = token_search(
        index, q, token_k, window, pad_id, budget)
    vals0 = vals[:, :, 0].astype(jnp.int32)

    logits, knn_raw_scores, inter_coef = mix(
        lm_logits, raw_knn_scores, vals0, num_rows=B,
        temp=temp, alpha=alpha, tau=tau, hidden_dim=D, budget=budget)

    logs = dict(knn_raw_scores=knn_raw_scores, knn_tokens=vals,
                knn_docids=doc_ids, knn_poses=poses, knn_coef=inter_coef)
    return logits, None, logs


# ------------------------------------------------------------------
if __name__ == "__main__":
    key = jax.random.PRNGKey(0)
    B, S, D, V = 2, 8, 128, 256
    passage_k, max_len = 4, 32          # -> index size N = 128 tokens per batch
    token_k, window, pad_id = 8, 1, PAD_ID
    temp, alpha, tau = 0.7, 0.1, 0.1

    keys = jax.random.split(key, 8)
    params = dict(
        embed=jax.random.normal(keys[0], (V, D), jnp.float32) * 0.02,
        w_h=jax.random.normal(keys[1], (D, D), jnp.float32) * 0.05,
        w_head=(jax.random.normal(keys[2], (D, V), jnp.float32) * 0.05).astype(jnp.bfloat16),
    )

    # synthetic retrieved passages (what build_token_index would produce)
    doc_ids = jax.random.randint(keys[3], (B, passage_k), 0, 100, jnp.int32)
    corpus_tokens = jax.random.randint(keys[4], (B * passage_k, max_len + 1), 1, V, jnp.int32)
    pos = jnp.arange(max_len + 1, dtype=jnp.int32)[None, :]
    plens = jax.random.randint(keys[5], (B * passage_k, 1), max_len - 4, max_len + 1, jnp.int32)
    corpus_tokens = jnp.where(pos < plens, corpus_tokens, pad_id)
    token_poses = jnp.where(corpus_tokens != pad_id, pos, pad_id).astype(jnp.int32)
    # synthetic penultimate hidden states of the LM over tokens[:, :-1]
    emb_hidden = jax.random.normal(keys[6], (B * passage_k, max_len, D),
                                   jnp.float32).astype(jnp.bfloat16)

    index = build_index(doc_ids, corpus_tokens, token_poses, emb_hidden, pad_id)

    tokens = jax.random.randint(keys[7], (B, S), 1, V, jnp.int32)
    logits, cache, logs = knn_transformer_forward(
        params, index, tokens, temp=temp, alpha=alpha, tau=tau,
        token_k=token_k, window=window, pad_id=pad_id)

    jax.block_until_ready(logits)
    jax.block_until_ready(logs['knn_raw_scores'])
    jax.block_until_ready(logs['knn_coef'])
    assert logits.shape == (B, 2 * V)
    assert logs['knn_tokens'].shape == (B, token_k, window)
    print("KERNEL_OK")
</pallas_src>

<mosaic_0001>
module attributes {stable_mosaic.version = 11 : i64} {
  func.func @lm_head_kernel(%arg0: i32, %arg1: memref<8x128xbf16, #tpu.memory_space<vmem>>, %arg2: memref<128x256xbf16, #tpu.memory_space<vmem>>, %arg3: memref<8x256xf32, #tpu.memory_space<vmem>>) attributes {dimension_semantics = [#tpu.dimension_semantics<parallel>], iteration_bounds = array<i64: 1>, scalar_prefetch = 0 : i64, scratch_operands = 0 : i64, tpu.core_type = #tpu.core_type<tc>, window_params = [{pipeline_mode = #tpu.pipeline_mode<synchronous>, transform_indices = @transform_0, window_bounds = array<i64: 8, 128>}, {transform_indices = @transform_1, window_bounds = array<i64: 128, 256>}, {transform_indices = @transform_2, window_bounds = array<i64: 8, 256>}]} {
    %c0 = arith.constant 0 : index
    %c0_0 = arith.constant 0 : index
    %0 = vector.load %arg1[%c0, %c0_0] : memref<8x128xbf16, #tpu.memory_space<vmem>>, vector<8x128xbf16>
    %c0_1 = arith.constant 0 : index
    %c0_2 = arith.constant 0 : index
    %1 = vector.load %arg2[%c0_1, %c0_2] : memref<128x256xbf16, #tpu.memory_space<vmem>>, vector<128x256xbf16>
    %cst = arith.constant dense<0.000000e+00> : vector<8x256xf32>
    %2 = tpu.matmul %0, %1, %cst {dimension_numbers = #tpu.dot_dimension_numbers<[1], [0], [0], [1], [0, 0, 1, 1], [], []>} : vector<8x128xbf16>, vector<128x256xbf16>, vector<8x256xf32> -> vector<8x256xf32>
    %c0_3 = arith.constant 0 : index
    %c0_4 = arith.constant 0 : index
    %3 = vector.load %arg3[%c0_3, %c0_4] : memref<8x256xf32, #tpu.memory_space<vmem>>, vector<8x256xf32>
    tpu.vector_store %arg3[%c0_3, %c0_4], %2 {strides = array<i32>} : memref<8x256xf32, #tpu.memory_space<vmem>>, vector<8x256xf32>,
    return
  }
  func.func @transform_0(%arg0: i32) -> (i32, i32) {
    %c0_i32 = arith.constant 0 : i32
    %c0_i32_0 = arith.constant 0 : i32
    %c0_i32_1 = arith.constant 0 : i32
    return %c0_i32, %c0_i32_0 : i32, i32
  }
  func.func @transform_1(%arg0: i32) -> (i32, i32) {
    %c0_i32 = arith.constant 0 : i32
    %c0_i32_0 = arith.constant 0 : i32
    return %c0_i32, %arg0 : i32, i32
  }
  func.func @transform_2(%arg0: i32) -> (i32, i32) {
    %c0_i32 = arith.constant 0 : i32
    %c0_i32_0 = arith.constant 0 : i32
    return %c0_i32, %arg0 : i32, i32
  }
}

</mosaic_0001>

<llo_original>
// kernel: tpu_custom_call.1
$region0: #{tpu_custom_call.1}
  #allocation0 [shape = 'u32[]', space=smem, size = 0x4, offset = 0x4, fixed_abs, tag = 'smem constant byte address 0x4 - core index']
  #allocation1 [shape = 'u32[144,128]{1,0:T(1,128)}', space=vmem, size = 0x12000, scoped, tag = 'internal scratch']
  %s0 = inlined_call_operand.hbm [shape: bf16[8,128], index: 0, kind: input, shape index: {}]
  %s1 = inlined_call_operand.hbm [shape: bf16[128,256], index: 1, kind: input, shape index: {}]
  %s2 = inlined_call_operand.hbm [shape: f32[8,256], index: 2, kind: output, shape index: {}]
  %s3 = sld [smem:[#allocation0]]
  $region26: #{tpu_custom_call.1} parent=0
    _
  %s5 = ssub.s32 1, %s3
  %s6 = scalar_select 0, %s5, %s3
  $region1: #{tpu_custom_call.1} parent=0
    #allocation2 [shape = 'u8[2048]{0}', space=vmem, size = 0x800, scoped, tag = 'input window, operand 0, single buffered']
    #allocation3 [shape = 's32[1]{0}', space=sflag, size = 0x4, scoped, tag = 'scoped memory for tpu_custom_call.1']
    #allocation4 [shape = 's32[1]{0}', space=sflag, size = 0x4, scoped, tag = 'scoped memory for tpu_custom_call.1']
    #allocation5 [shape = 'u8[65536]{0}', space=vmem, size = 0x10000, scoped, tag = 'input window, operand 1, single buffered']
    #allocation6 [shape = 's32[1]{0}', space=sflag, size = 0x4, scoped, tag = 'scoped memory for tpu_custom_call.1']
    #allocation7 [shape = 'u8[8192]{0}', space=vmem, size = 0x2000, scoped, tag = 'output window, operand 0, single buffered']
    %7 = vsyncpa [#allocation3], 0
    %8 = vsyncpa [#allocation6], 0
    %9 = vsyncpa [#allocation4], 0
    // Predicated region
    $region2: #{tpu_custom_call.1} parent=1 // pred_check
      _
    $region3: #{tpu_custom_call.1} parent=1 // pred_check_branch
      %11 = sbr.rel (0) target = $region5
    $region4: #{tpu_custom_call.1} parent=1 // pred_region
      %s13 = ssub.s32 64, 64
      %14 = vsyncadd [#allocation3], %s13
      %s16 = sshll.u32 [#allocation2], 4
      %s17 = int_to_ptr.vmem [resolvable:$true] %s16
      %19 = dma.hbm_to_vmem [thread:$0]  %s0, 64, %s17, [#allocation3]
    $region5: #{tpu_custom_call.1} parent=1 // pred_fallthru
      _
    // Predicated region
    $region6: #{tpu_custom_call.1} parent=1 // pred_check
      _
    $region7: #{tpu_custom_call.1} parent=1 // pred_check_branch
      %21 = sbr.rel (0) target = $region9
    $region8: #{tpu_custom_call.1} parent=1 // pred_region
      %s23 = ssub.s32 2048, 2048
      %24 = vsyncadd [#allocation6], %s23
      %s25 = sshll.u32 [#allocation5], 4
      %s26 = int_to_ptr.vmem [resolvable:$true] %s25
      %31 = dma.hbm_to_vmem [thread:$0]  %s1, 2048, %s26, [#allocation6], 128, 128, 8
    $region9: #{tpu_custom_call.1} parent=1 // pred_fallthru
      _
    // Predicated region
    $region10: #{tpu_custom_call.1} parent=1 // pred_check
      _
    $region11: #{tpu_custom_call.1} parent=1 // pred_check_branch
      %33 = sbr.rel (0) target = $region13
    $region12: #{tpu_custom_call.1} parent=1 // pred_region
      %34 = dma.done [#allocation3], 64
    $region13: #{tpu_custom_call.1} parent=1 // pred_fallthru
      _
    // Predicated region
    $region14: #{tpu_custom_call.1} parent=1 // pred_check
      _
    $region15: #{tpu_custom_call.1} parent=1 // pred_check_branch
      %36 = sbr.rel (0) target = $region17
    $region16: #{tpu_custom_call.1} parent=1 // pred_region
      %37 = dma.done [#allocation6], 2048
    $region17: #{tpu_custom_call.1} parent=1 // pred_fallthru
      _
    %v39 = vld [vmem:[#allocation2] sm:$0xf]
    %v40 = vld [vmem:[#allocation5] sm:$0xff]
    %v41 = vld [vmem:[#allocation5 + $0x8] sm:$0xff]
    %v42 = vld [vmem:[#allocation5 + $0x10] sm:$0xff]
    %v43 = vld [vmem:[#allocation5 + $0x18] sm:$0xff]
    %v44 = vld [vmem:[#allocation5 + $0x20] sm:$0xff]
    %v45 = vld [vmem:[#allocation5 + $0x28] sm:$0xff]
    %v46 = vld [vmem:[#allocation5 + $0x30] sm:$0xff]
    %v47 = vld [vmem:[#allocation5 + $0x38] sm:$0xff]
    %v48 = vld [vmem:[#allocation5 + $0x40] sm:$0xff]
    %v49 = vld [vmem:[#allocation5 + $0x48] sm:$0xff]
    %v50 = vld [vmem:[#allocation5 + $0x50] sm:$0xff]
    %v51 = vld [vmem:[#allocation5 + $0x58] sm:$0xff]
    %v52 = vld [vmem:[#allocation5 + $0x60] sm:$0xff]
    %v53 = vld [vmem:[#allocation5 + $0x68] sm:$0xff]
    %v54 = vld [vmem:[#allocation5 + $0x70] sm:$0xff]
    %v55 = vld [vmem:[#allocation5 + $0x78] sm:$0xff]
    %v72 = vunpack.c.l.b16 %v40
    %v73 = vunpack.c.h.b16 %v40
    %v74 = vunpack.c.l.b16 %v41
    %v75 = vunpack.c.h.b16 %v41
    %v76 = vunpack.c.l.b16 %v42
    %v77 = vunpack.c.h.b16 %v42
    %v78 = vunpack.c.l.b16 %v43
    %v79 = vunpack.c.h.b16 %v43
    %v80 = vunpack.c.l.b16 %v44
    %v81 = vunpack.c.h.b16 %v44
    %v82 = vunpack.c.l.b16 %v45
    %v83 = vunpack.c.h.b16 %v45
    %v84 = vunpack.c.l.b16 %v46
    %v85 = vunpack.c.h.b16 %v46
    %v86 = vunpack.c.l.b16 %v47
    %v87 = vunpack.c.h.b16 %v47
    %v88 = vunpack.c.l.b16 %v48
    %v89 = vunpack.c.h.b16 %v48
    %v90 = vunpack.c.l.b16 %v49
    %v91 = vunpack.c.h.b16 %v49
    %v92 = vunpack.c.l.b16 %v50
    %v93 = vunpack.c.h.b16 %v50
    %v94 = vunpack.c.l.b16 %v51
    %v95 = vunpack.c.h.b16 %v51
    %v96 = vunpack.c.l.b16 %v52
    %v97 = vunpack.c.h.b16 %v52
    %v98 = vunpack.c.l.b16 %v53
    %v99 = vunpack.c.h.b16 %v53
    %v100 = vunpack.c.l.b16 %v54
    %v101 = vunpack.c.h.b16 %v54
    %v102 = vunpack.c.l.b16 %v55
    %v103 = vunpack.c.h.b16 %v55
    %v104 = vpack.c.b16 %v74, %v72
    %v105 = vpack.c.b16 %v75, %v73
    %v106 = vpack.c.b16 %v78, %v76
    %v107 = vpack.c.b16 %v79, %v77
    %v108 = vpack.c.b16 %v82, %v80
    %v109 = vpack.c.b16 %v83, %v81
    %v110 = vpack.c.b16 %v86, %v84
    %v111 = vpack.c.b16 %v87, %v85
    %v112 = vpack.c.b16 %v90, %v88
    %v113 = vpack.c.b16 %v91, %v89
    %v114 = vpack.c.b16 %v94, %v92
    %v115 = vpack.c.b16 %v95, %v93
    %v116 = vpack.c.b16 %v98, %v96
    %v117 = vpack.c.b16 %v99, %v97
    %v118 = vpack.c.b16 %v102, %v100
    %v119 = vpack.c.b16 %v103, %v101
    %136 = vmatprep.subr.bf16.mxu0 %v105
    %137 = vmatpush1.bf16.msra.mxu0 %v104
    %138 = vmatprep.subr.bf16.mxu0 %v107
    %139 = vmatpush1.bf16.msra.mxu0 %v106
    %140 = vmatprep.subr.bf16.mxu0 %v109
    %141 = vmatpush1.bf16.msra.mxu0 %v108
    %142 = vmatprep.subr.bf16.mxu0 %v111
    %143 = vmatpush1.bf16.msra.mxu0 %v110
    %144 = vmatprep.subr.bf16.mxu0 %v113
    %145 = vmatpush1.bf16.msra.mxu0 %v112
    %146 = vmatprep.subr.bf16.mxu0 %v115
    %147 = vmatpush1.bf16.msra.mxu0 %v114
    %148 = vmatprep.subr.bf16.mxu0 %v117
    %149 = vmatpush1.bf16.msra.mxu0 %v116
    %150 = vmatprep.subr.bf16.mxu0 %v119
    %151 = vmatpush1.bf16.msra.mxu0 %v118
    %152 = vmatprep.subr.bf16.mxu0 0
    %153 = vmatpush1.bf16.msra.mxu0 0
    %154 = vmatprep.subr.bf16.mxu0 0
    %155 = vmatpush1.bf16.msra.mxu0 0
    %156 = vmatprep.subr.bf16.mxu0 0
    %157 = vmatpush1.bf16.msra.mxu0 0
    %158 = vmatprep.subr.bf16.mxu0 0
    %159 = vmatpush1.bf16.msra.mxu0 0
    %160 = vmatprep.subr.bf16.mxu0 0
    %161 = vmatpush1.bf16.msra.mxu0 0
    %162 = vmatprep.subr.bf16.mxu0 0
    %163 = vmatpush1.bf16.msra.mxu0 0
    %164 = vmatprep.subr.bf16.mxu0 0
    %165 = vmatpush1.bf16.msra.mxu0 0
    %166 = vmatprep.subr.bf16.mxu0 0
    %167 = vmatpush1.bf16.msra.mxu0 0
    %168 = vmatprep.mubr.bf16.mxu0 0
    %169 = vmatmul.mubr.bf16.gmra.mrb[0].mxu0 %v39
    %v170 = vpop.f32.mrb[0].mxu0
    %v171 = vadd.f32 0.0, %v170
    %v172 = vpop.f32.mrb[0].mxu0
    %v173 = vadd.f32 0.0, %v172
    %v174 = vpop.f32.mrb[0].mxu0
    %v175 = vpop.f32.mrb[0].mxu0
    %176 = vdwg.mxu0
    %177 = vst [vmem:[#allocation7] sm:$0xff] %v171
    %178 = vst [vmem:[#allocation7 + $0x8] sm:$0xff] %v173
    // Predicated region
    $region18: #{tpu_custom_call.1} parent=1 // pred_check
      _
    $region19: #{tpu_custom_call.1} parent=1 // pred_check_branch
      %180 = sbr.rel (0) target = $region21
    $region20: #{tpu_custom_call.1} parent=1 // pred_region
      %s182 = ssub.s32 256, 256
      %183 = vsyncadd [#allocation4], %s182
      %s185 = sshll.u32 [#allocation7], 4
      %s186 = int_to_ptr.vmem [resolvable:$true] %s185
      %188 = dma.vmem_to_hbm [thread:$0]  %s186, 256, %s2, [#allocation4]
    $region21: #{tpu_custom_call.1} parent=1 // pred_fallthru
      _
    // Predicated region
    $region22: #{tpu_custom_call.1} parent=1 // pred_check
      _
    $region23: #{tpu_custom_call.1} parent=1 // pred_check_branch
      %190 = sbr.rel (0) target = $region25
    $region24: #{tpu_custom_call.1} parent=1 // pred_region
      %191 = dma.done [#allocation4], 256
    $region25: #{tpu_custom_call.1} parent=1 // pred_fallthru
      _
    %192 = vsyncpa [#allocation3], 1
    %193 = vsyncpa [#allocation6], 1
    %194 = vsyncpa [#allocation4], 1

</llo_original>
